<compile_context>
chip_gen: v7x
topology: tpu7x:2x2x1
jax: 0.10.0
libtpu: 0.0.40
codegen_flags: <defaults>
</compile_context>

<pallas_src>
import math

import jax
import jax.numpy as jnp
from jax.experimental import pallas as pl
from jax.experimental.pallas import tpu as pltpu


def _round_up(v, m):
    return ((v + m - 1) // m) * m


def _pick_tile(n_pad, cap):
    """Largest multiple of 128 that divides n_pad and is <= cap (min 128)."""
    best = 128
    t = 128
    while t <= min(cap, n_pad):
        if n_pad % t == 0:
            best = t
        t += 128
    return best


def _make_gcn_kernel(tk, x_resident):
    """Grid = (row tiles i, contraction tiles k); k is the reduction axis.

    adj_ref : (TM, TK)                 tile of (bf16) adjacency
    x_ref   : (N_pad|TK, C_in_pad)     augmented node features (ones column)
    wt_ref  : (C_in_pad, C_out_pad)    W^T with bias folded into the ones row
    o_ref   : (TM, C_out_pad)          output tile (resident across k)
    acc_ref : (TM, C_in_pad) f32       accumulator for adj @ x_aug
    """

    def kernel(adj_ref, x_ref, wt_ref, o_ref, acc_ref):
        k = pl.program_id(1)

        @pl.when(k == 0)
        def _():
            acc_ref[...] = jnp.zeros_like(acc_ref)

        if x_resident:
            # x_aug fully resident in VMEM: slice the k-th chunk (no re-fetch).
            start = pl.multiple_of(k * tk, tk)
            x_tile = x_ref[pl.ds(start, tk), :]
        else:
            x_tile = x_ref[...]

        # Neighborhood aggregation in the (narrow) input-feature space.
        acc_ref[...] += jnp.dot(
            adj_ref[...], x_tile, preferred_element_type=jnp.float32
        )

        # Project to output features once per row tile (last k step). Because
        # x_aug has a ones column and wt carries the bias row, this equals
        # adj @ (x W^T + b) exactly (no normalization assumption on adj).
        @pl.when(k == pl.num_programs(1) - 1)
        def _():
            o_ref[...] = jnp.dot(
                acc_ref[...], wt_ref[...], preferred_element_type=jnp.float32
            ).astype(o_ref.dtype)

    return kernel


def gcn_layer(x, weight, bias, adj, *, tm=512, tk=1024,
              compute_dtype=jnp.bfloat16):
    """x: [N, C_in], weight: [C_out, C_in], bias: [C_out], adj: [N, N] (dense).

    Returns adj @ (x @ weight.T + bias), shape [N, C_out] in x.dtype.
    """
    n, c_in = x.shape
    c_out = weight.shape[0]
    out_dtype = x.dtype
    cdt = jnp.dtype(compute_dtype)
    csz = cdt.itemsize
    osz = jnp.dtype(out_dtype).itemsize

    # Lane-dense padded feature dims; +1 input column reserved for the bias.
    c_in_pad = _round_up(c_in + 1, 128)
    c_out_pad = _round_up(c_out, 128)

    # 128-aligned N; tiles are multiples of 128 that divide n_pad exactly
    # (no lcm padding blow-up). Cap tm so the parallel row axis keeps >=2
    # tiles when possible (lets v7x megacore shard the row tiles).
    n_pad = _round_up(n, 128)
    tk = _pick_tile(n_pad, tk)
    tm = _pick_tile(n_pad, min(tm, max(128, n_pad // 2)))

    # Adjacency: avoid the O(N^2) pad copy when already aligned; otherwise
    # fuse pad + cast into a single pass.
    if n == n_pad:
        adj_p = adj.astype(cdt)
    else:
        adj_p = jnp.zeros((n_pad, n_pad), cdt).at[:n, :n].set(adj.astype(cdt))

    # Augmented node features: [x | 1 | 0-pad]  (cheap, N x 128).
    x_p = jnp.zeros((n_pad, c_in_pad), cdt)
    x_p = x_p.at[:n, :c_in].set(x.astype(cdt))
    x_p = x_p.at[:n, c_in].set(1.0)

    # Augmented W^T: rows 0..C_in-1 = weight.T, row C_in = bias, rest zero.
    wt_p = jnp.zeros((c_in_pad, c_out_pad), cdt)
    wt_p = wt_p.at[:c_in, :c_out].set(weight.T.astype(cdt))
    wt_p = wt_p.at[c_in, :c_out].set(bias.astype(cdt))

    # Keep x_aug whole-array resident in VMEM when small enough (fetched once,
    # no per-row-tile re-stream); otherwise stream per k tile.
    x_resident = n_pad * c_in_pad * csz <= 4 * 1024 * 1024

    grid = (n_pad // tm, n_pad // tk)

    if x_resident:
        x_spec = pl.BlockSpec((n_pad, c_in_pad), lambda i, k: (0, 0))
    else:
        x_spec = pl.BlockSpec((tk, c_in_pad), lambda i, k: (k, 0))

    # VMEM budget (double-buffered inputs/outputs + f32 accumulator) + slack.
    vmem_bytes = (
        2 * tm * tk * csz
        + 2 * (n_pad if x_resident else tk) * c_in_pad * csz
        + 2 * c_in_pad * c_out_pad * csz
        + 2 * tm * c_out_pad * osz
        + tm * c_in_pad * 4
    )
    vmem_limit = min(64 * 1024 * 1024,
                     max(32 * 1024 * 1024, int(vmem_bytes * 1.5)))

    flops = 2 * n_pad * n_pad * c_in_pad + 2 * n_pad * c_in_pad * c_out_pad
    bytes_accessed = (
        n_pad * n_pad * csz
        + (1 if x_resident else grid[0]) * n_pad * c_in_pad * csz
        + c_in_pad * c_out_pad * csz
        + n_pad * c_out_pad * osz
    )

    out_pad = pl.pallas_call(
        _make_gcn_kernel(tk, x_resident),
        out_shape=jax.ShapeDtypeStruct((n_pad, c_out_pad), out_dtype),
        grid_spec=pltpu.PrefetchScalarGridSpec(
            num_scalar_prefetch=0,
            grid=grid,
            in_specs=[
                pl.BlockSpec((tm, tk), lambda i, k: (i, k)),               # adj tile
                x_spec,                                                    # x_aug
                pl.BlockSpec((c_in_pad, c_out_pad), lambda i, k: (0, 0)),  # W^T + b
            ],
            out_specs=pl.BlockSpec((tm, c_out_pad), lambda i, k: (i, 0)),
            scratch_shapes=[pltpu.VMEM((tm, c_in_pad), jnp.float32)],
        ),
        compiler_params=pltpu.CompilerParams(
            dimension_semantics=("parallel", "arbitrary"),
            vmem_limit_bytes=vmem_limit,
        ),
        cost_estimate=pl.CostEstimate(
            flops=flops, transcendentals=0, bytes_accessed=bytes_accessed),
    )(adj_p, x_p, wt_p)

    return out_pad[:n, :c_out]


def glorot_uniform(key, shape):
    # torch_geometric 'glorot': U(-a, a), a = sqrt(6 / (fan_in + fan_out))
    fan_out, fan_in = shape
    a = math.sqrt(6.0 / (fan_in + fan_out))
    return jax.random.uniform(key, shape, jnp.float32, -a, a)


if __name__ == "__main__":
    key = jax.random.PRNGKey(0)
    k_x, k_adj, k_w = jax.random.split(key, 3)

    num_nodes, in_channels, out_channels = 16, 8, 32

    x = jax.random.normal(k_x, (num_nodes, in_channels), jnp.float32)

    # Deterministic synthetic (dense) adjacency: sparse-ish 0/1 matrix with
    # self-loops, row-normalized (typical GCN preprocessing).
    adj_raw = (jax.random.uniform(k_adj, (num_nodes, num_nodes)) < 0.25).astype(
        jnp.float32
    )
    adj_raw = adj_raw + jnp.eye(num_nodes, dtype=jnp.float32)
    adj = adj_raw / jnp.sum(adj_raw, axis=1, keepdims=True)

    weight = glorot_uniform(k_w, (out_channels, in_channels))
    bias = jax.random.normal(key, (out_channels,), jnp.float32) * 0.1

    out = gcn_layer(x, weight, bias, adj)
    out = jax.block_until_ready(out)

    # Reference check in plain JAX (exact module semantics, f32). The kernel
    # streams bf16 inputs with an f32 accumulator, so tolerance reflects
    # bf16 input rounding only.
    ref = adj @ (x @ weight.T + bias[None, :])
    assert out.shape == (num_nodes, out_channels)
    assert jnp.allclose(out, ref, atol=5e-2, rtol=5e-2), (
        float(jnp.max(jnp.abs(out - ref)))
    )

    print("KERNEL_OK")
</pallas_src>

<mosaic_0001>
module attributes {stable_mosaic.version = 11 : i64} {
  func.func @kernel(%arg0: i32, %arg1: i32, %arg2: memref<128x128xbf16, #tpu.memory_space<vmem>>, %arg3: memref<128x128xbf16, #tpu.memory_space<vmem>>, %arg4: memref<128x128xbf16, #tpu.memory_space<vmem>>, %arg5: memref<128x128xf32, #tpu.memory_space<vmem>>, %arg6: memref<128x128xf32, #tpu.memory_space<vmem>>) attributes {dimension_semantics = [#tpu.dimension_semantics<parallel>, #tpu.dimension_semantics<arbitrary>], iteration_bounds = array<i64: 1, 1>, scalar_prefetch = 0 : i64, scratch_operands = 1 : i64, tpu.core_type = #tpu.core_type<tc>, window_params = [{transform_indices = @transform_0, window_bounds = array<i64: 128, 128>}, {pipeline_mode = #tpu.pipeline_mode<synchronous>, transform_indices = @transform_1, window_bounds = array<i64: 128, 128>}, {pipeline_mode = #tpu.pipeline_mode<synchronous>, transform_indices = @transform_2, window_bounds = array<i64: 128, 128>}, {transform_indices = @transform_3, window_bounds = array<i64: 128, 128>}]} {
    %c0_i32 = arith.constant 0 : i32
    %0 = arith.cmpi eq, %arg1, %c0_i32 : i32
    %1 = arith.extui %0 : i1 to i32
    %c0_i32_0 = arith.constant 0 : i32
    %2 = arith.cmpi ne, %1, %c0_i32_0 : i32
    scf.if %2 {
      %cst_9 = arith.constant 0.000000e+00 : f32
      %15 = vector.broadcast %cst_9 : f32 to vector<128x128xf32>
      %c0_10 = arith.constant 0 : index
      %c0_11 = arith.constant 0 : index
      %16 = vector.load %arg6[%c0_10, %c0_11] : memref<128x128xf32, #tpu.memory_space<vmem>>, vector<128x128xf32>
      tpu.vector_store %arg6[%c0_10, %c0_11], %15 {strides = array<i32>} : memref<128x128xf32, #tpu.memory_space<vmem>>, vector<128x128xf32>,
    } else {
    }
    %c128_i32 = arith.constant 128 : i32
    %3 = arith.muli %arg1, %c128_i32 : i32
    %4 = tpu.assume_multiple %3, 128 : i32
    %5 = arith.index_cast %4 : i32 to index
    %c0 = arith.constant 0 : index
    %6 = vector.load %arg3[%5, %c0] : memref<128x128xbf16, #tpu.memory_space<vmem>>, vector<128x128xbf16>
    %c0_1 = arith.constant 0 : index
    %c0_2 = arith.constant 0 : index
    %7 = vector.load %arg6[%c0_1, %c0_2] : memref<128x128xf32, #tpu.memory_space<vmem>>, vector<128x128xf32>
    %c0_3 = arith.constant 0 : index
    %c0_4 = arith.constant 0 : index
    %8 = vector.load %arg2[%c0_3, %c0_4] : memref<128x128xbf16, #tpu.memory_space<vmem>>, vector<128x128xbf16>
    %cst = arith.constant dense<0.000000e+00> : vector<128x128xf32>
    %9 = tpu.matmul %8, %6, %cst {dimension_numbers = #tpu.dot_dimension_numbers<[1], [0], [0], [1], [0, 0, 1, 1], [], []>} : vector<128x128xbf16>, vector<128x128xbf16>, vector<128x128xf32> -> vector<128x128xf32>
    %10 = arith.addf %7, %9 : vector<128x128xf32>
    %c0_5 = arith.constant 0 : index
    %c0_6 = arith.constant 0 : index
    %11 = vector.load %arg6[%c0_5, %c0_6] : memref<128x128xf32, #tpu.memory_space<vmem>>, vector<128x128xf32>
    tpu.vector_store %arg6[%c0_5, %c0_6], %10 {strides = array<i32>} : memref<128x128xf32, #tpu.memory_space<vmem>>, vector<128x128xf32>,
    %c0_i32_7 = arith.constant 0 : i32
    %12 = arith.cmpi eq, %arg1, %c0_i32_7 : i32
    %13 = arith.extui %12 : i1 to i32
    %c0_i32_8 = arith.constant 0 : i32
    %14 = arith.cmpi ne, %13, %c0_i32_8 : i32
    scf.if %14 {
      %c0_9 = arith.constant 0 : index
      %c0_10 = arith.constant 0 : index
      %15 = vector.load %arg6[%c0_9, %c0_10] : memref<128x128xf32, #tpu.memory_space<vmem>>, vector<128x128xf32>
      %c0_11 = arith.constant 0 : index
      %c0_12 = arith.constant 0 : index
      %16 = vector.load %arg4[%c0_11, %c0_12] : memref<128x128xbf16, #tpu.memory_space<vmem>>, vector<128x128xbf16>
      %cst_13 = arith.constant dense<0.000000e+00> : vector<128x128xf32>
      %17 = tpu.matmul %15, %16, %cst_13 {dimension_numbers = #tpu.dot_dimension_numbers<[1], [0], [0], [1], [0, 0, 1, 1], [], []>} : vector<128x128xf32>, vector<128x128xbf16>, vector<128x128xf32> -> vector<128x128xf32>
      %c0_14 = arith.constant 0 : index
      %c0_15 = arith.constant 0 : index
      %18 = vector.load %arg5[%c0_14, %c0_15] : memref<128x128xf32, #tpu.memory_space<vmem>>, vector<128x128xf32>
      tpu.vector_store %arg5[%c0_14, %c0_15], %17 {strides = array<i32>} : memref<128x128xf32, #tpu.memory_space<vmem>>, vector<128x128xf32>,
    } else {
    }
    return
  }
  func.func @transform_0(%arg0: i32, %arg1: i32) -> (i32, i32) {
    %c0_i32 = arith.constant 0 : i32
    return %arg0, %arg1 : i32, i32
  }
  func.func @transform_1(%arg0: i32, %arg1: i32) -> (i32, i32) {
    %c0_i32 = arith.constant 0 : i32
    %c0_i32_0 = arith.constant 0 : i32
    %c0_i32_1 = arith.constant 0 : i32
    return %c0_i32, %c0_i32_0 : i32, i32
  }
  func.func @transform_2(%arg0: i32, %arg1: i32) -> (i32, i32) {
    %c0_i32 = arith.constant 0 : i32
    %c0_i32_0 = arith.constant 0 : i32
    %c0_i32_1 = arith.constant 0 : i32
    return %c0_i32, %c0_i32_0 : i32, i32
  }
  func.func @transform_3(%arg0: i32, %arg1: i32) -> (i32, i32) {
    %c0_i32 = arith.constant 0 : i32
    %c0_i32_0 = arith.constant 0 : i32
    return %arg0, %c0_i32 : i32, i32
  }
}

</mosaic_0001>

<llo_original>
// kernel: tpu_custom_call.1
$region0: #{tpu_custom_call.1}
  #allocation0 [shape = 'u32[]', space=smem, size = 0x4, offset = 0x4, fixed_abs, tag = 'smem constant byte address 0x4 - core index']
  #allocation1 [shape = 'u32[144,128]{1,0:T(1,128)}', space=vmem, size = 0x12000, scoped, tag = 'internal scratch']
  #allocation2 [shape = 'f32[128,128]{1,0:T(8,128)}', space=vmem, size = 0x10000, scoped, tag = 'scratch operand']
  %s0 = inlined_call_operand.hbm [shape: bf16[128,128], index: 0, kind: input, shape index: {}]
  %s1 = inlined_call_operand.hbm [shape: bf16[128,128], index: 1, kind: input, shape index: {}]
  %s2 = inlined_call_operand.hbm [shape: bf16[128,128], index: 2, kind: input, shape index: {}]
  %s3 = inlined_call_operand.hbm [shape: f32[128,128], index: 3, kind: output, shape index: {}]
  %s4 = sld [smem:[#allocation0]]
  $region42: #{tpu_custom_call.1} parent=0
    _
  %s6 = ssub.s32 1, %s4
  %s7 = scalar_select 0, %s6, %s4
  $region1: #{tpu_custom_call.1} parent=0
    #allocation3 [shape = 'u8[32768]{0}', space=vmem, size = 0x8000, scoped, tag = 'input window, operand 0, single buffered']
    #allocation4 [shape = 's32[1]{0}', space=sflag, size = 0x4, scoped, tag = 'scoped memory for tpu_custom_call.1']
    #allocation5 [shape = 's32[1]{0}', space=sflag, size = 0x4, scoped, tag = 'scoped memory for tpu_custom_call.1']
    #allocation6 [shape = 'u8[32768]{0}', space=vmem, size = 0x8000, scoped, tag = 'input window, operand 1, single buffered']
    #allocation7 [shape = 's32[1]{0}', space=sflag, size = 0x4, scoped, tag = 'scoped memory for tpu_custom_call.1']
    #allocation8 [shape = 'u8[32768]{0}', space=vmem, size = 0x8000, scoped, tag = 'input window, operand 2, single buffered']
    #allocation9 [shape = 'u8[65536]{0}', space=vmem, size = 0x10000, scoped, tag = 'output window, operand 0, single buffered']
    %8 = vsyncpa [#allocation4], 0
    %9 = vsyncpa [#allocation7], 0
    %10 = vsyncpa [#allocation5], 0
    // Predicated region
    $region2: #{tpu_custom_call.1} parent=1 // pred_check
      _
    $region3: #{tpu_custom_call.1} parent=1 // pred_check_branch
      %12 = sbr.rel (0) target = $region5
    $region4: #{tpu_custom_call.1} parent=1 // pred_region
      %s14 = ssub.s32 1024, 1024
      %15 = vsyncadd [#allocation4], %s14
      %s16 = sshll.u32 [#allocation3], 4
      %s17 = int_to_ptr.vmem [resolvable:$true] %s16
      %22 = dma.hbm_to_vmem [thread:$0]  %s0, 1024, %s17, [#allocation4], 64, 64, 4
    $region5: #{tpu_custom_call.1} parent=1 // pred_fallthru
      _
    // Predicated region
    $region6: #{tpu_custom_call.1} parent=1 // pred_check
      _
    $region7: #{tpu_custom_call.1} parent=1 // pred_check_branch
      %24 = sbr.rel (0) target = $region9
    $region8: #{tpu_custom_call.1} parent=1 // pred_region
      %s26 = ssub.s32 1024, 1024
      %27 = vsyncadd [#allocation7], %s26
      %s28 = sshll.u32 [#allocation6], 4
      %s29 = int_to_ptr.vmem [resolvable:$true] %s28
      %34 = dma.hbm_to_vmem [thread:$0]  %s1, 1024, %s29, [#allocation7], 64, 64, 4
    $region9: #{tpu_custom_call.1} parent=1 // pred_fallthru
      _
    // Predicated region
    $region10: #{tpu_custom_call.1} parent=1 // pred_check
      _
    $region11: #{tpu_custom_call.1} parent=1 // pred_check_branch
      %36 = sbr.rel (0) target = $region13
    $region12: #{tpu_custom_call.1} parent=1 // pred_region
      %s38 = ssub.s32 1024, 1024
      %39 = vsyncadd [#allocation7], %s38
      %s40 = sshll.u32 [#allocation8], 4
      %s41 = int_to_ptr.vmem [resolvable:$true] %s40
      %46 = dma.hbm_to_vmem [thread:$0]  %s2, 1024, %s41, [#allocation7], 64, 64, 4
    $region13: #{tpu_custom_call.1} parent=1 // pred_fallthru
      _
    // Predicated region
    $region14: #{tpu_custom_call.1} parent=1 // pred_check
      _
    $region15: #{tpu_custom_call.1} parent=1 // pred_check_branch
      %48 = sbr.rel (0) target = $region17
    $region16: #{tpu_custom_call.1} parent=1 // pred_region
      %49 = dma.done [#allocation4], 1024
    $region17: #{tpu_custom_call.1} parent=1 // pred_fallthru
      _
    // Predicated region
    $region18: #{tpu_custom_call.1} parent=1 // pred_check
      _
    $region19: #{tpu_custom_call.1} parent=1 // pred_check_branch
      %51 = sbr.rel (0) target = $region21
    $region20: #{tpu_custom_call.1} parent=1 // pred_region
      %52 = dma.done [#allocation7], 1024
    $region21: #{tpu_custom_call.1} parent=1 // pred_fallthru
      _
    // Predicated region
    $region22: #{tpu_custom_call.1} parent=1 // pred_check
      _
    $region23: #{tpu_custom_call.1} parent=1 // pred_check_branch
      %54 = sbr.rel (0) target = $region25
    $region24: #{tpu_custom_call.1} parent=1 // pred_region
      %55 = dma.done [#allocation7], 1024
    $region25: #{tpu_custom_call.1} parent=1 // pred_fallthru
      _
    %p57 = scmp.eq.s32.totalorder 0, 0
    // Predicated region
    $region26: #{tpu_custom_call.1} parent=1 // pred_check
      %p58 = pneg %p57
    $region27: #{tpu_custom_call.1} parent=1 // pred_check_branch
      %60 = sbr.rel (%p58) target = $region29
    $region28: #{tpu_custom_call.1} parent=1 // pred_region
      %61 = vst [vmem:[#allocation2] sm:$0xff] 0.0
      %62 = vst [vmem:[#allocation2 + $0x8] sm:$0xff] 0.0
      %63 = vst [vmem:[#allocation2 + $0x10] sm:$0xff] 0.0
      %64 = vst [vmem:[#allocation2 + $0x18] sm:$0xff] 0.0
      %65 = vst [vmem:[#allocation2 + $0x20] sm:$0xff] 0.0
      %66 = vst [vmem:[#allocation2 + $0x28] sm:$0xff] 0.0
      %67 = vst [vmem:[#allocation2 + $0x30] sm:$0xff] 0.0
      %68 = vst [vmem:[#allocation2 + $0x38] sm:$0xff] 0.0
      %69 = vst [vmem:[#allocation2 + $0x40] sm:$0xff] 0.0
      %70 = vst [vmem:[#allocation2 + $0x48] sm:$0xff] 0.0
      %71 = vst [vmem:[#allocation2 + $0x50] sm:$0xff] 0.0
      %72 = vst [vmem:[#allocation2 + $0x58] sm:$0xff] 0.0
      %73 = vst [vmem:[#allocation2 + $0x60] sm:$0xff] 0.0
      %74 = vst [vmem:[#allocation2 + $0x68] sm:$0xff] 0.0
      %75 = vst [vmem:[#allocation2 + $0x70] sm:$0xff] 0.0
      %76 = vst [vmem:[#allocation2 + $0x78] sm:$0xff] 0.0
    $region29: #{tpu_custom_call.1} parent=1 // pred_fallthru
      _
    %s77 = smul.u32 0, 128
    %s78 = sshra.s32 %s77, 3
    %s79 = sand.u32 %s77, 7
    %s80 = smul.addr %s78, 4
    %s81 = scalar_lea.vmem [#allocation6], %s80
    %v82 = vld [vmem:[%s81] sm:$0xf]
    %v83 = vld [vmem:[%s81 + $0x4] sm:$0xf]
    %v84 = vld [vmem:[%s81 + $0x8] sm:$0xf]
    %v85 = vld [vmem:[%s81 + $0xc] sm:$0xf]
    %v86 = vld [vmem:[%s81 + $0x10] sm:$0xf]
    %v87 = vld [vmem:[%s81 + $0x14] sm:$0xf]
    %v88 = vld [vmem:[%s81 + $0x18] sm:$0xf]
    %v89 = vld [vmem:[%s81 + $0x1c] sm:$0xf]
    %v90 = vld [vmem:[%s81 + $0x20] sm:$0xf]
    %v91 = vld [vmem:[%s81 + $0x24] sm:$0xf]
    %v92 = vld [vmem:[%s81 + $0x28] sm:$0xf]
    %v93 = vld [vmem:[%s81 + $0x2c] sm:$0xf]
    %v94 = vld [vmem:[%s81 + $0x30] sm:$0xf]
    %v95 = vld [vmem:[%s81 + $0x34] sm:$0xf]
    %v96 = vld [vmem:[%s81 + $0x38] sm:$0xf]
    %v97 = vld [vmem:[%s81 + $0x3c] sm:$0xf]
    %v98 = vld [vmem:[#allocation2] sm:$0xff]
    %v99 = vld [vmem:[#allocation2 + $0x8] sm:$0xff]
    %v100 = vld [vmem:[#allocation2 + $0x10] sm:$0xff]
    %v101 = vld [vmem:[#allocation2 + $0x18] sm:$0xff]
    %v102 = vld [vmem:[#allocation2 + $0x20] sm:$0xff]
    %v103 = vld [vmem:[#allocation2 + $0x28] sm:$0xff]
    %v104 = vld [vmem:[#allocation2 + $0x30] sm:$0xff]
    %v105 = vld [vmem:[#allocation2 + $0x38] sm:$0xff]
    %v106 = vld [vmem:[#allocation2 + $0x40] sm:$0xff]
    %v107 = vld [vmem:[#allocation2 + $0x48] sm:$0xff]
    %v108 = vld [vmem:[#allocation2 + $0x50] sm:$0xff]
    %v109 = vld [vmem:[#allocation2 + $0x58] sm:$0xff]
    %v110 = vld [vmem:[#allocation2 + $0x60] sm:$0xff]
    %v111 = vld [vmem:[#allocation2 + $0x68] sm:$0xff]
    %v112 = vld [vmem:[#allocation2 + $0x70] sm:$0xff]
    %v113 = vld [vmem:[#allocation2 + $0x78] sm:$0xff]
    %v114 = vld [vmem:[#allocation3] sm:$0xf]
    %v115 = vld [vmem:[#allocation3 + $0x4] sm:$0xf]
    %v116 = vld [vmem:[#allocation3 + $0x8] sm:$0xf]
    %v117 = vld [vmem:[#allocation3 + $0xc] sm:$0xf]
    %v118 = vld [vmem:[#allocation3 + $0x10] sm:$0xf]
    %v119 = vld [vmem:[#allocation3 + $0x14] sm:$0xf]
    %v120 = vld [vmem:[#allocation3 + $0x18] sm:$0xf]
    %v121 = vld [vmem:[#allocation3 + $0x1c] sm:$0xf]
    %v122 = vld [vmem:[#allocation3 + $0x20] sm:$0xf]
    %v123 = vld [vmem:[#allocation3 + $0x24] sm:$0xf]
    %v124 = vld [vmem:[#allocation3 + $0x28] sm:$0xf]
    %v125 = vld [vmem:[#allocation3 + $0x2c] sm:$0xf]
    %v126 = vld [vmem:[#allocation3 + $0x30] sm:$0xf]
    %v127 = vld [vmem:[#allocation3 + $0x34] sm:$0xf]
    %v128 = vld [vmem:[#allocation3 + $0x38] sm:$0xf]
    %v129 = vld [vmem:[#allocation3 + $0x3c] sm:$0xf]
    %v146 = vunpack.c.l.b16 %v114
    %v147 = vunpack.c.l.b16 %v115
    %v148 = vunpack.c.l.b16 %v116
    %v149 = vunpack.c.l.b16 %v117
    %v150 = vunpack.c.l.b16 %v118
    %v151 = vunpack.c.l.b16 %v119
    %v152 = vunpack.c.l.b16 %v120
    %v153 = vunpack.c.l.b16 %v121
    %v154 = vunpack.c.l.b16 %v122
    %v155 = vunpack.c.l.b16 %v123
    %v156 = vunpack.c.l.b16 %v124
    %v157 = vunpack.c.l.b16 %v125
    %v158 = vunpack.c.l.b16 %v126
    %v159 = vunpack.c.l.b16 %v127
    %v160 = vunpack.c.l.b16 %v128
    %v161 = vunpack.c.l.b16 %v129
    %v162 = vpack.c.b16 %v147, %v146
    %v163 = vpack.c.b16 %v149, %v148
    %v164 = vpack.c.b16 %v151, %v150
    %v165 = vpack.c.b16 %v153, %v152
    %v166 = vpack.c.b16 %v155, %v154
    %v167 = vpack.c.b16 %v157, %v156
    %v168 = vpack.c.b16 %v159, %v158
    %v169 = vpack.c.b16 %v161, %v160
    %v194 = vunpack.c.l.b16 %v82
    %v195 = vunpack.c.l.b16 %v83
    %v196 = vunpack.c.l.b16 %v84
    %v197 = vunpack.c.l.b16 %v85
    %v198 = vunpack.c.l.b16 %v86
    %v199 = vunpack.c.l.b16 %v87
    %v200 = vunpack.c.l.b16 %v88
    %v201 = vunpack.c.l.b16 %v89
    %v202 = vunpack.c.l.b16 %v90
    %v203 = vunpack.c.l.b16 %v91
    %v204 = vunpack.c.l.b16 %v92
    %v205 = vunpack.c.l.b16 %v93
    %v206 = vunpack.c.l.b16 %v94
    %v207 = vunpack.c.l.b16 %v95
    %v208 = vunpack.c.l.b16 %v96
    %v209 = vunpack.c.l.b16 %v97
    %v210 = vpack.c.b16 %v195, %v194
    %v211 = vpack.c.b16 %v197, %v196
    %v212 = vpack.c.b16 %v199, %v198
    %v213 = vpack.c.b16 %v201, %v200
    %v214 = vpack.c.b16 %v203, %v202
    %v215 = vpack.c.b16 %v205, %v204
    %v216 = vpack.c.b16 %v207, %v206
    %v217 = vpack.c.b16 %v209, %v208
    %226 = vmatprep.subr.bf16.mxu0 0
    %227 = vmatpush1.bf16.msra.mxu0 %v210
    %228 = vmatprep.subr.bf16.mxu0 0
    %229 = vmatpush1.bf16.msra.mxu0 %v211
    %230 = vmatprep.subr.bf16.mxu0 0
    %231 = vmatpush1.bf16.msra.mxu0 %v212
    %232 = vmatprep.subr.bf16.mxu0 0
    %233 = vmatpush1.bf16.msra.mxu0 %v213
    %234 = vmatprep.subr.bf16.mxu0 0
    %235 = vmatpush1.bf16.msra.mxu0 %v214
    %236 = vmatprep.subr.bf16.mxu0 0
    %237 = vmatpush1.bf16.msra.mxu0 %v215
    %238 = vmatprep.subr.bf16.mxu0 0
    %239 = vmatpush1.bf16.msra.mxu0 %v216
    %240 = vmatprep.subr.bf16.mxu0 0
    %241 = vmatpush1.bf16.msra.mxu0 %v217
    %242 = vmatprep.subr.bf16.mxu0 0
    %243 = vmatpush1.bf16.msra.mxu0 0
    %244 = vmatprep.subr.bf16.mxu0 0
    %245 = vmatpush1.bf16.msra.mxu0 0
    %246 = vmatprep.subr.bf16.mxu0 0
    %247 = vmatpush1.bf16.msra.mxu0 0
    %248 = vmatprep.subr.bf16.mxu0 0
    %249 = vmatpush1.bf16.msra.mxu0 0
    %250 = vmatprep.subr.bf16.mxu0 0
    %251 = vmatpush1.bf16.msra.mxu0 0
    %252 = vmatprep.subr.bf16.mxu0 0
    %253 = vmatpush1.bf16.msra.mxu0 0
    %254 = vmatprep.subr.bf16.mxu0 0
    %255 = vmatpush1.bf16.msra.mxu0 0
    %256 = vmatprep.subr.bf16.mxu0 0
    %257 = vmatpush1.bf16.msra.mxu0 0
    %258 = vmatprep.mubr.bf16.mxu0 0
    %259 = vmatmul.mubr.bf16.gmra.mrb[0].mxu0 %v162
    %v260 = vpop.f32.mrb[0].mxu0
    %v261 = vadd.f32 0.0, %v260
    %v262 = vpop.f32.mrb[0].mxu0
    %v263 = vpop.f32.mrb[0].mxu0
    %v264 = vadd.f32 0.0, %v263
    %v265 = vpop.f32.mrb[0].mxu0
    %266 = vmatprep.mubr.bf16.mxu0 0
    %267 = vmatmul.mubr.bf16.gmra.mrb[0].mxu0 %v163
    %v268 = vpop.f32.mrb[0].mxu0
    %v269 = vadd.f32 0.0, %v268
    %v270 = vpop.f32.mrb[0].mxu0
    %v271 = vpop.f32.mrb[0].mxu0
    %v272 = vadd.f32 0.0, %v271
    %v273 = vpop.f32.mrb[0].mxu0
    %274 = vmatprep.mubr.bf16.mxu0 0
    %275 = vmatmul.mubr.bf16.gmra.mrb[0].mxu0 %v164
    %v276 = vpop.f32.mrb[0].mxu0
    %v277 = vadd.f32 0.0, %v276
    %v278 = vpop.f32.mrb[0].mxu0
    %v279 = vpop.f32.mrb[0].mxu0
    %v280 = vadd.f32 0.0, %v279
    %v281 = vpop.f32.mrb[0].mxu0
    %282 = vmatprep.mubr.bf16.mxu0 0
    %283 = vmatmul.mubr.bf16.gmra.mrb[0].mxu0 %v165
    %v284 = vpop.f32.mrb[0].mxu0
    %v285 = vadd.f32 0.0, %v284
    %v286 = vpop.f32.mrb[0].mxu0
    %v287 = vpop.f32.mrb[0].mxu0
    %v288 = vadd.f32 0.0, %v287
    %v289 = vpop.f32.mrb[0].mxu0
    %290 = vmatprep.mubr.bf16.mxu0 0
    %291 = vmatmul.mubr.bf16.gmra.mrb[0].mxu0 %v166
    %v292 = vpop.f32.mrb[0].mxu0
    %v293 = vadd.f32 0.0, %v292
    %v294 = vpop.f32.mrb[0].mxu0
    %v295 = vpop.f32.mrb[0].mxu0
    %v296 = vadd.f32 0.0, %v295
    %v297 = vpop.f32.mrb[0].mxu0
    %298 = vmatprep.mubr.bf16.mxu0 0
    %299 = vmatmul.mubr.bf16.gmra.mrb[0].mxu0 %v167
    %v300 = vpop.f32.mrb[0].mxu0
    %v301 = vadd.f32 0.0, %v300
    %v302 = vpop.f32.mrb[0].mxu0
    %v303 = vpop.f32.mrb[0].mxu0
    %v304 = vadd.f32 0.0, %v303
    %v305 = vpop.f32.mrb[0].mxu0
    %306 = vmatprep.mubr.bf16.mxu0 0
    %307 = vmatmul.mubr.bf16.gmra.mrb[0].mxu0 %v168
    %v308 = vpop.f32.mrb[0].mxu0
    %v309 = vadd.f32 0.0, %v308
    %v310 = vpop.f32.mrb[0].mxu0
    %v311 = vpop.f32.mrb[0].mxu0
    %v312 = vadd.f32 0.0, %v311
    %v313 = vpop.f32.mrb[0].mxu0
    %314 = vmatprep.mubr.bf16.mxu0 0
    %315 = vmatmul.mubr.bf16.gmra.mrb[0].mxu0 %v169
    %v316 = vpop.f32.mrb[0].mxu0
    %v317 = vadd.f32 0.0, %v316
    %v318 = vpop.f32.mrb[0].mxu0
    %v319 = vpop.f32.mrb[0].mxu0
    %v320 = vadd.f32 0.0, %v319
    %v321 = vpop.f32.mrb[0].mxu0
    %322 = vdwg.mxu0
    %v323 = vadd.f32 %v98, %v261
    %v324 = vadd.f32 %v99, %v264
    %v325 = vadd.f32 %v100, %v269
    %v326 = vadd.f32 %v101, %v272
    %v327 = vadd.f32 %v102, %v277
    %v328 = vadd.f32 %v103, %v280
    %v329 = vadd.f32 %v104, %v285
    %v330 = vadd.f32 %v105, %v288
    %v331 = vadd.f32 %v106, %v293
    %v332 = vadd.f32 %v107, %v296
    %v333 = vadd.f32 %v108, %v301
    %v334 = vadd.f32 %v109, %v304
    %v335 = vadd.f32 %v110, %v309
    %v336 = vadd.f32 %v111, %v312
    %v337 = vadd.f32 %v112, %v317
    %v338 = vadd.f32 %v113, %v320
    %339 = vst [vmem:[#allocation2] sm:$0xff] %v323
    %340 = vst [vmem:[#allocation2 + $0x8] sm:$0xff] %v324
    %341 = vst [vmem:[#allocation2 + $0x10] sm:$0xff] %v325
    %342 = vst [vmem:[#allocation2 + $0x18] sm:$0xff] %v326
    %343 = vst [vmem:[#allocation2 + $0x20] sm:$0xff] %v327
    %344 = vst [vmem:[#allocation2 + $0x28] sm:$0xff] %v328
    %345 = vst [vmem:[#allocation2 + $0x30] sm:$0xff] %v329
    %346 = vst [vmem:[#allocation2 + $0x38] sm:$0xff] %v330
    %347 = vst [vmem:[#allocation2 + $0x40] sm:$0xff] %v331
    %348 = vst [vmem:[#allocation2 + $0x48] sm:$0xff] %v332
    %349 = vst [vmem:[#allocation2 + $0x50] sm:$0xff] %v333
    %350 = vst [vmem:[#allocation2 + $0x58] sm:$0xff] %v334
    %351 = vst [vmem:[#allocation2 + $0x60] sm:$0xff] %v335
    %352 = vst [vmem:[#allocation2 + $0x68] sm:$0xff] %v336
    %353 = vst [vmem:[#allocation2 + $0x70] sm:$0xff] %v337
    %354 = vst [vmem:[#allocation2 + $0x78] sm:$0xff] %v338
    // Predicated region
    $region30: #{tpu_custom_call.1} parent=1 // pred_check
      %p355 = pneg %p57
    $region31: #{tpu_custom_call.1} parent=1 // pred_check_branch
      %357 = sbr.rel (%p355) target = $region33
    $region32: #{tpu_custom_call.1} parent=1 // pred_region
      %v358 = vld [vmem:[#allocation2] sm:$0xff]
      %v359 = vld [vmem:[#allocation2 + $0x8] sm:$0xff]
      %v360 = vld [vmem:[#allocation2 + $0x10] sm:$0xff]
      %v361 = vld [vmem:[#allocation2 + $0x18] sm:$0xff]
      %v362 = vld [vmem:[#allocation2 + $0x20] sm:$0xff]
      %v363 = vld [vmem:[#allocation2 + $0x28] sm:$0xff]
      %v364 = vld [vmem:[#allocation2 + $0x30] sm:$0xff]
      %v365 = vld [vmem:[#allocation2 + $0x38] sm:$0xff]
      %v366 = vld [vmem:[#allocation2 + $0x40] sm:$0xff]
      %v367 = vld [vmem:[#allocation2 + $0x48] sm:$0xff]
      %v368 = vld [vmem:[#allocation2 + $0x50] sm:$0xff]
      %v369 = vld [vmem:[#allocation2 + $0x58] sm:$0xff]
      %v370 = vld [vmem:[#allocation2 + $0x60] sm:$0xff]
      %v371 = vld [vmem:[#allocation2 + $0x68] sm:$0xff]
      %v372 = vld [vmem:[#allocation2 + $0x70] sm:$0xff]
      %v373 = vld [vmem:[#allocation2 + $0x78] sm:$0xff]
      %v374 = vld [vmem:[#allocation8] sm:$0xf]
      %v375 = vld [vmem:[#allocation8 + $0x4] sm:$0xf]
      %v376 = vld [vmem:[#allocation8 + $0x8] sm:$0xf]
      %v377 = vld [vmem:[#allocation8 + $0xc] sm:$0xf]
      %v378 = vld [vmem:[#allocation8 + $0x10] sm:$0xf]
      %v379 = vld [vmem:[#allocation8 + $0x14] sm:$0xf]
      %v380 = vld [vmem:[#allocation8 + $0x18] sm:$0xf]
      %v381 = vld [vmem:[#allocation8 + $0x1c] sm:$0xf]
      %v382 = vld [vmem:[#allocation8 + $0x20] sm:$0xf]
      %v383 = vld [vmem:[#allocation8 + $0x24] sm:$0xf]
      %v384 = vld [vmem:[#allocation8 + $0x28] sm:$0xf]
      %v385 = vld [vmem:[#allocation8 + $0x2c] sm:$0xf]
      %v386 = vld [vmem:[#allocation8 + $0x30] sm:$0xf]
      %v387 = vld [vmem:[#allocation8 + $0x34] sm:$0xf]
      %v388 = vld [vmem:[#allocation8 + $0x38] sm:$0xf]
      %v389 = vld [vmem:[#allocation8 + $0x3c] sm:$0xf]
      %v406 = vunpack.c.l.b16 %v374
      %v407 = vunpack.c.l.b16 %v375
      %v408 = vunpack.c.l.b16 %v376
      %v409 = vunpack.c.l.b16 %v377
      %v410 = vunpack.c.l.b16 %v378
      %v411 = vunpack.c.l.b16 %v379
      %v412 = vunpack.c.l.b16 %v380
      %v413 = vunpack.c.l.b16 %v381
      %v414 = vunpack.c.l.b16 %v382
      %v415 = vunpack.c.l.b16 %v383
      %v416 = vunpack.c.l.b16 %v384
      %v417 = vunpack.c.l.b16 %v385
      %v418 = vunpack.c.l.b16 %v386
      %v419 = vunpack.c.l.b16 %v387
      %v420 = vunpack.c.l.b16 %v388
      %v421 = vunpack.c.l.b16 %v389
      %v422 = vpack.c.b16 %v407, %v406
      %v423 = vpack.c.b16 %v409, %v408
      %v424 = vpack.c.b16 %v411, %v410
      %v425 = vpack.c.b16 %v413, %v412
      %v426 = vpack.c.b16 %v415, %v414
      %v427 = vpack.c.b16 %v417, %v416
      %v428 = vpack.c.b16 %v419, %v418
      %v429 = vpack.c.b16 %v421, %v420
      %438 = vmatprep.subr.bf16.mxu0 0
      %439 = vmatpush1.bf16.msra.mxu0 %v422
      %440 = vmatprep.subr.bf16.mxu0 0
      %441 = vmatpush1.bf16.msra.mxu0 %v423
      %442 = vmatprep.subr.bf16.mxu0 0
      %443 = vmatpush1.bf16.msra.mxu0 %v424
      %444 = vmatprep.subr.bf16.mxu0 0
      %445 = vmatpush1.bf16.msra.mxu0 %v425
      %446 = vmatprep.subr.bf16.mxu0 0
      %447 = vmatpush1.bf16.msra.mxu0 %v426
      %448 = vmatprep.subr.bf16.mxu0 0
      %449 = vmatpush1.bf16.msra.mxu0 %v427
      %450 = vmatprep.subr.bf16.mxu0 0
      %451 = vmatpush1.bf16.msra.mxu0 %v428
      %452 = vmatprep.subr.bf16.mxu0 0
      %453 = vmatpush1.bf16.msra.mxu0 %v429
      %454 = vmatprep.subr.bf16.mxu0 0
      %455 = vmatpush1.bf16.msra.mxu0 0
      %456 = vmatprep.subr.bf16.mxu0 0
      %457 = vmatpush1.bf16.msra.mxu0 0
      %458 = vmatprep.subr.bf16.mxu0 0
      %459 = vmatpush1.bf16.msra.mxu0 0
      %460 = vmatprep.subr.bf16.mxu0 0
      %461 = vmatpush1.bf16.msra.mxu0 0
      %462 = vmatprep.subr.bf16.mxu0 0
      %463 = vmatpush1.bf16.msra.mxu0 0
      %464 = vmatprep.subr.bf16.mxu0 0
      %465 = vmatpush1.bf16.msra.mxu0 0
      %466 = vmatprep.subr.bf16.mxu0 0
      %467 = vmatpush1.bf16.msra.mxu0 0
      %468 = vmatprep.subr.bf16.mxu0 0
      %469 = vmatpush1.bf16.msra.mxu0 0
      %470 = vmatprep.mubr.f32.mxu0 0.0
      %471 = vmatmul.mubr.f32.gmra.mrb[0].mxu0 %v358
      %v472 = vpop.f32.mrb[0].mxu0
      %v473 = vadd.f32 0.0, %v472
      %v474 = vpop.f32.mrb[0].mxu0
      %475 = vmatprep.mubr.f32.mxu0 0.0
      %476 = vmatmul.mubr.f32.gmra.mrb[0].mxu0 %v359
      %v477 = vpop.f32.mrb[0].mxu0
      %v478 = vadd.f32 0.0, %v477
      %v479 = vpop.f32.mrb[0].mxu0
      %480 = vmatprep.mubr.f32.mxu0 0.0
      %481 = vmatmul.mubr.f32.gmra.mrb[0].mxu0 %v360
      %v482 = vpop.f32.mrb[0].mxu0
      %v483 = vadd.f32 0.0, %v482
      %v484 = vpop.f32.mrb[0].mxu0
      %485 = vmatprep.mubr.f32.mxu0 0.0
      %486 = vmatmul.mubr.f32.gmra.mrb[0].mxu0 %v361
      %v487 = vpop.f32.mrb[0].mxu0
      %v488 = vadd.f32 0.0, %v487
      %v489 = vpop.f32.mrb[0].mxu0
      %490 = vmatprep.mubr.f32.mxu0 0.0
      %491 = vmatmul.mubr.f32.gmra.mrb[0].mxu0 %v362
      %v492 = vpop.f32.mrb[0].mxu0
      %v493 = vadd.f32 0.0, %v492
      %v494 = vpop.f32.mrb[0].mxu0
      %495 = vmatprep.mubr.f32.mxu0 0.0
      %496 = vmatmul.mubr.f32.gmra.mrb[0].mxu0 %v363
      %v497 = vpop.f32.mrb[0].mxu0
      %v498 = vadd.f32 0.0, %v497
      %v499 = vpop.f32.mrb[0].mxu0
      %500 = vmatprep.mubr.f32.mxu0 0.0
      %501 = vmatmul.mubr.f32.gmra.mrb[0].mxu0 %v364
      %v502 = vpop.f32.mrb[0].mxu0
      %v503 = vadd.f32 0.0, %v502
      %v504 = vpop.f32.mrb[0].mxu0
      %505 = vmatprep.mubr.f32.mxu0 0.0
      %506 = vmatmul.mubr.f32.gmra.mrb[0].mxu0 %v365
      %v507 = vpop.f32.mrb[0].mxu0
      %v508 = vadd.f32 0.0, %v507
      %v509 = vpop.f32.mrb[0].mxu0
      %510 = vmatprep.mubr.f32.mxu0 0.0
      %511 = vmatmul.mubr.f32.gmra.mrb[0].mxu0 %v366
      %v512 = vpop.f32.mrb[0].mxu0
      %v513 = vadd.f32 0.0, %v512
      %v514 = vpop.f32.mrb[0].mxu0
      %515 = vmatprep.mubr.f32.mxu0 0.0
      %516 = vmatmul.mubr.f32.gmra.mrb[0].mxu0 %v367
      %v517 = vpop.f32.mrb[0].mxu0
      %v518 = vadd.f32 0.0, %v517
      %v519 = vpop.f32.mrb[0].mxu0
      %520 = vmatprep.mubr.f32.mxu0 0.0
      %521 = vmatmul.mubr.f32.gmra.mrb[0].mxu0 %v368
      %v522 = vpop.f32.mrb[0].mxu0
      %v523 = vadd.f32 0.0, %v522
      %v524 = vpop.f32.mrb[0].mxu0
      %525 = vmatprep.mubr.f32.mxu0 0.0
      %526 = vmatmul.mubr.f32.gmra.mrb[0].mxu0 %v369
      %v527 = vpop.f32.mrb[0].mxu0
      %v528 = vadd.f32 0.0, %v527
      %v529 = vpop.f32.mrb[0].mxu0
      %530 = vmatprep.mubr.f32.mxu0 0.0
      %531 = vmatmul.mubr.f32.gmra.mrb[0].mxu0 %v370
      %v532 = vpop.f32.mrb[0].mxu0
      %v533 = vadd.f32 0.0, %v532
      %v534 = vpop.f32.mrb[0].mxu0
      %535 = vmatprep.mubr.f32.mxu0 0.0
      %536 = vmatmul.mubr.f32.gmra.mrb[0].mxu0 %v371
      %v537 = vpop.f32.mrb[0].mxu0
      %v538 = vadd.f32 0.0, %v537
      %v539 = vpop.f32.mrb[0].mxu0
      %540 = vmatprep.mubr.f32.mxu0 0.0
      %541 = vmatmul.mubr.f32.gmra.mrb[0].mxu0 %v372
      %v542 = vpop.f32.mrb[0].mxu0
      %v543 = vadd.f32 0.0, %v542
      %v544 = vpop.f32.mrb[0].mxu0
      %545 = vmatprep.mubr.f32.mxu0 0.0
      %546 = vmatmul.mubr.f32.gmra.mrb[0].mxu0 %v373
      %v547 = vpop.f32.mrb[0].mxu0
      %v548 = vadd.f32 0.0, %v547
      %v549 = vpop.f32.mrb[0].mxu0
      %550 = vdwg.mxu0
      %551 = vst [vmem:[#allocation9] sm:$0xff] %v473
      %552 = vst [vmem:[#allocation9 + $0x8] sm:$0xff] %v478
      %553 = vst [vmem:[#allocation9 + $0x10] sm:$0xff] %v483
      %554 = vst [vmem:[#allocation9 + $0x18] sm:$0xff] %v488
      %555 = vst [vmem:[#allocation9 + $0x20] sm:$0xff] %v493
      %556 = vst [vmem:[#allocation9 + $0x28] sm:$0xff] %v498
      %557 = vst [vmem:[#allocation9 + $0x30] sm:$0xff] %v503
      %558 = vst [vmem:[#allocation9 + $0x38] sm:$0xff] %v508
      %559 = vst [vmem:[#allocation9 + $0x40] sm:$0xff] %v513
      %560 = vst [vmem:[#allocation9 + $0x48] sm:$0xff] %v518
      %561 = vst [vmem:[#allocation9 + $0x50] sm:$0xff] %v523
      %562 = vst [vmem:[#allocation9 + $0x58] sm:$0xff] %v528
      %563 = vst [vmem:[#allocation9 + $0x60] sm:$0xff] %v533
      %564 = vst [vmem:[#allocation9 + $0x68] sm:$0xff] %v538
      %565 = vst [vmem:[#allocation9 + $0x70] sm:$0xff] %v543
      %566 = vst [vmem:[#allocation9 + $0x78] sm:$0xff] %v548
    $region33: #{tpu_custom_call.1} parent=1 // pred_fallthru
      _
    // Predicated region
    $region34: #{tpu_custom_call.1} parent=1 // pred_check
      _
    $region35: #{tpu_custom_call.1} parent=1 // pred_check_branch
      %568 = sbr.rel (0) target = $region37
    $region36: #{tpu_custom_call.1} parent=1 // pred_region
      %s570 = ssub.s32 2048, 2048
      %571 = vsyncadd [#allocation5], %s570
      %s572 = sshll.u32 [#allocation9], 4
      %s573 = int_to_ptr.vmem [resolvable:$true] %s572
      %578 = dma.vmem_to_hbm [thread:$0]  %s573, 2048, %s3, [#allocation5], 128, 128, 8
    $region37: #{tpu_custom_call.1} parent=1 // pred_fallthru
      _
    // Predicated region
    $region38: #{tpu_custom_call.1} parent=1 // pred_check
      _
    $region39: #{tpu_custom_call.1} parent=1 // pred_check_branch
      %580 = sbr.rel (0) target = $region41
    $region40: #{tpu_custom_call.1} parent=1 // pred_region
      %581 = dma.done [#allocation5], 2048
    $region41: #{tpu_custom_call.1} parent=1 // pred_fallthru
      _
    %582 = vsyncpa [#allocation4], 1
    %583 = vsyncpa [#allocation7], 1
    %584 = vsyncpa [#allocation5], 1

</llo_original>
